<compile_context>
chip_gen: v7x
topology: tpu7x:2x2x1
jax: 0.10.0
libtpu: 0.0.40
codegen_flags: <defaults>
</compile_context>

<pallas_src>
import functools

import jax
import jax.numpy as jnp
from jax.experimental import pallas as pl
from jax.experimental.pallas import tpu as pltpu


def _identity_kernel(x_ref, o_ref):
    # Straight VMEM copy of the current tile.
    o_ref[...] = x_ref[...]


_TARGET_TILE_BYTES = 1 << 20                  # ~1 MiB per block (≈4 MiB resident, dbl-buffered)
_LANE_CANDIDATES = (2048, 1024, 512, 256, 128)


@functools.partial(jax.jit, donate_argnums=(0,))
def place_holder_forward(x: jax.Array) -> jax.Array:
    """Pallas implementation of PlaceHolder.forward (identity)."""
    orig_shape = x.shape
    n = x.size
    if n == 0:
        return x

    itemsize = jnp.dtype(x.dtype).itemsize
    sublane_pack = max(8, 32 // itemsize)     # 8 f32 / 16 bf16 / 32 int8

    # Pick a lane-dense 2D view that tiles the flat buffer exactly (no pad,
    # no tail slice).  Fallback: the array's own trailing dim, which is exempt
    # from the 128-divisibility rule because the block spans the full dim.
    lanes = None
    for w in _LANE_CANDIDATES:
        if n % w == 0:
            lanes = w
            break
    if lanes is None:
        lanes = orig_shape[-1] if x.ndim >= 1 else 1
    rows = n // lanes

    # Block rows sized for ~1 MiB tiles, kept at native sublane-pack granularity.
    tile_rows = _TARGET_TILE_BYTES // (lanes * itemsize)
    tile_rows = max(sublane_pack, (tile_rows // sublane_pack) * sublane_pack)
    tile_rows = min(tile_rows, rows)          # == rows (full dim) when input is small
    grid = (pl.cdiv(rows, tile_rows),)        # ragged tail block masked by Pallas

    x2d = x.reshape(rows, lanes)              # free bitcast under jit (contiguous)

    out2d = pl.pallas_call(
        _identity_kernel,
        out_shape=jax.ShapeDtypeStruct((rows, lanes), x.dtype),
        grid_spec=pltpu.PrefetchScalarGridSpec(
            num_scalar_prefetch=0,
            grid=grid,
            in_specs=[pl.BlockSpec((tile_rows, lanes), lambda i: (i, 0))],
            out_specs=pl.BlockSpec((tile_rows, lanes), lambda i: (i, 0)),
        ),
        compiler_params=pltpu.CompilerParams(
            dimension_semantics=("parallel",),
            vmem_limit_bytes=32 * 1024 * 1024,   # safe on v5e/v6e/v7x; we use ~4 MiB
        ),
        input_output_aliases={0: 0},          # write back into the (donated) input buffer
    )(x2d)

    return out2d.reshape(orig_shape)


if __name__ == "__main__":
    import numpy as np

    key = jax.random.PRNGKey(0)
    # NCHW input, small shapes: batch=2, channels=4, spatial=16x16
    x = jax.random.normal(key, (2, 4, 16, 16), dtype=jnp.float32)
    x_host = np.asarray(x)                    # reference copy (input buffer is donated)

    y = place_holder_forward(x)
    jax.block_until_ready(y)

    assert y.shape == x_host.shape
    assert y.dtype == x_host.dtype
    assert bool(np.all(np.asarray(y) == x_host))

    print("KERNEL_OK")
</pallas_src>

<mosaic_0001>
module attributes {stable_mosaic.version = 11 : i64} {
  func.func @_identity_kernel(%arg0: i32, %arg1: memref<1x2048xf32, #tpu.memory_space<vmem>>, %arg2: memref<1x2048xf32, #tpu.memory_space<vmem>>) attributes {dimension_semantics = [#tpu.dimension_semantics<parallel>], iteration_bounds = array<i64: 1>, scalar_prefetch = 0 : i64, scratch_operands = 0 : i64, tpu.core_type = #tpu.core_type<tc>, window_params = [{transform_indices = @transform_0, window_bounds = array<i64: 1, 2048>}, {transform_indices = @transform_1, window_bounds = array<i64: 1, 2048>}]} {
    %c0 = arith.constant 0 : index
    %c0_0 = arith.constant 0 : index
    %0 = vector.load %arg1[%c0, %c0_0] : memref<1x2048xf32, #tpu.memory_space<vmem>>, vector<1x2048xf32>
    %c0_1 = arith.constant 0 : index
    %c0_2 = arith.constant 0 : index
    %1 = vector.load %arg2[%c0_1, %c0_2] : memref<1x2048xf32, #tpu.memory_space<vmem>>, vector<1x2048xf32>
    tpu.vector_store %arg2[%c0_1, %c0_2], %0 {strides = array<i32>} : memref<1x2048xf32, #tpu.memory_space<vmem>>, vector<1x2048xf32>,
    return
  }
  func.func @transform_0(%arg0: i32) -> (i32, i32) {
    %c0_i32 = arith.constant 0 : i32
    %c0_i32_0 = arith.constant 0 : i32
    return %arg0, %c0_i32 : i32, i32
  }
  func.func @transform_1(%arg0: i32) -> (i32, i32) {
    %c0_i32 = arith.constant 0 : i32
    %c0_i32_0 = arith.constant 0 : i32
    return %arg0, %c0_i32 : i32, i32
  }
}

</mosaic_0001>

<llo_original>
// kernel: place_holder_forward.1
$region0: #{place_holder_forward.1}
  #allocation0 [shape = 'u32[]', space=smem, size = 0x4, offset = 0x4, fixed_abs, tag = 'smem constant byte address 0x4 - core index']
  #allocation1 [shape = 'u32[144,128]{1,0:T(1,128)}', space=vmem, size = 0x12000, scoped, tag = 'internal scratch']
  %s0 = inlined_call_operand.vmem [shape: f32[1,2048], index: 0, kind: input, shape index: {}, may-alias: {0,1}]
  %s1 = inlined_call_operand.vmem [shape: f32[1,2048], index: 1, kind: output, shape index: {}, may-alias: {0,1}]
  %s2 = sld [smem:[#allocation0]]
  $region14: #{place_holder_forward.1} parent=0
    _
  %s4 = ssub.s32 1, %s2
  %s5 = scalar_select 0, %s4, %s2
  // Predicated region
  $region2: #{place_holder_forward.1} parent=0 // pred_check
    _
  $region3: #{place_holder_forward.1} parent=0 // pred_check_branch
    %7 = sbr.rel (0) target = $region5
  $region4: #{place_holder_forward.1} parent=0 // pred_region
    _
  $region5: #{place_holder_forward.1} parent=0 // pred_fallthru
    _
  %v8 = vld [vmem:[%s0] sm:$0xff]
  %v9 = vld [vmem:[%s0 + $0x8] sm:$0xff]
  %10 = vst [vmem:[%s1] sm:$0xff] %v8
  %11 = vst [vmem:[%s1 + $0x8] sm:$0xff] %v9
  // Predicated region
  $region6: #{place_holder_forward.1} parent=0 // pred_check
    _
  $region7: #{place_holder_forward.1} parent=0 // pred_check_branch
    %13 = sbr.rel (0) target = $region9
  $region8: #{place_holder_forward.1} parent=0 // pred_region
    _
  $region9: #{place_holder_forward.1} parent=0 // pred_fallthru
    _
  // Predicated region
  $region10: #{place_holder_forward.1} parent=0 // pred_check
    _
  $region11: #{place_holder_forward.1} parent=0 // pred_check_branch
    %15 = sbr.rel (0) target = $region13
  $region12: #{place_holder_forward.1} parent=0 // pred_region
    _
  $region13: #{place_holder_forward.1} parent=0 // pred_fallthru
    _

</llo_original>
